<compile_context>
chip_gen: v5e
topology: v5e:2x2
jax: 0.10.0
libtpu: 0.0.40
codegen_flags: <defaults>
</compile_context>

<pallas_src>
import functools

import jax
import jax.numpy as jnp
from jax.experimental import pallas as pl
from jax.experimental.pallas import tpu as pltpu

_LANE = 128        # TPU lane width: lane-dense padding target for hidden features
_SUBLANE = 8       # f32 sublane tile (batch-tile row alignment)
_MAX_TILE_B = 2048 # batch tile cap (amortizes ~0.35us/grid-step overhead)


def _round_up(n, m):
    return ((n + m - 1) // m) * m


def _cdiv(a, b):
    return (a + b - 1) // b


def _actor_mlp_kernel(x_ref, w1_ref, b1_ref, w2_ref, b2_ref, w3_ref, b3_ref,
                      o_ref, *, max_action, action_dim):
    """One batch tile of the 3-layer Actor MLP, fully resident in VMEM."""
    x = x_ref[...].astype(jnp.bfloat16)                       # MXU wants bf16 operands
    h1 = jnp.tanh(
        jnp.dot(x, w1_ref[...], preferred_element_type=jnp.float32)
        + b1_ref[...])
    h2 = jnp.tanh(
        jnp.dot(h1.astype(jnp.bfloat16), w2_ref[...],
                preferred_element_type=jnp.float32)
        + b2_ref[...])
    out = jnp.tanh(
        jnp.dot(h2.astype(jnp.bfloat16), w3_ref[...],
                preferred_element_type=jnp.float32)
        + b3_ref[...])
    if max_action != 1.0:                                      # static; skipped if 1.0
        out = max_action * out
    # Store only the real action_dim columns -> HBM output is (tile_b, action_dim).
    o_ref[...] = out[:, :action_dim].astype(o_ref.dtype)


@functools.partial(jax.jit, static_argnames=("max_action",))
def actor_forward(x, w1, b1, w2, b2, w3, b3, max_action=1.0):
    """x: (B, state_dim) f32 -> (B, action_dim) f32, = max_action * tanh(MLP(x))."""
    batch, state_dim = x.shape
    hidden1 = w1.shape[1]
    hidden2 = w2.shape[1]
    action_dim = w3.shape[1]

    # ---- lane-dense zero padding of parameters (mathematically exact) ----
    h_pad = _round_up(max(hidden1, hidden2), _LANE)
    out_pad = _round_up(action_dim, _LANE)

    # Weights cast to bf16 (MXU operands); biases stay f32 (added to f32 accumulator).
    w1p = jnp.pad(w1, ((0, 0), (0, h_pad - hidden1))).astype(jnp.bfloat16)
    b1p = jnp.pad(b1, ((0, 0), (0, h_pad - hidden1)))
    w2p = jnp.pad(w2, ((0, h_pad - hidden1), (0, h_pad - hidden2))).astype(jnp.bfloat16)
    b2p = jnp.pad(b2, ((0, 0), (0, h_pad - hidden2)))
    w3p = jnp.pad(w3, ((0, h_pad - hidden2), (0, out_pad - action_dim))).astype(jnp.bfloat16)
    b3p = jnp.pad(b3, ((0, 0), (0, out_pad - action_dim)))

    # ---- balanced batch tiling: weights resident, activation tiles streamed ----
    batch_r = _round_up(batch, _SUBLANE)
    num_tiles = _cdiv(batch_r, _MAX_TILE_B)
    if batch >= 2 * _SUBLANE:
        # >=2 grid steps so the "parallel" axis shards across v7x's 2 TensorCores.
        num_tiles = max(num_tiles, 2)
    tile_b = _round_up(_cdiv(batch_r, num_tiles), _SUBLANE)
    batch_pad = num_tiles * tile_b
    x_in = jnp.pad(x, ((0, batch_pad - batch), (0, 0))) if batch_pad != batch else x
    grid = (num_tiles,)

    flops = 2 * batch_pad * (state_dim * h_pad + h_pad * h_pad + h_pad * out_pad)
    transcendentals = batch_pad * (2 * h_pad + out_pad)
    bytes_accessed = (4 * x_in.size                                    # f32 input
                      + 2 * (w1p.size + w2p.size + w3p.size)           # bf16 weights
                      + 4 * (b1p.size + b2p.size + b3p.size)           # f32 biases
                      + 4 * batch_pad * action_dim)                    # f32 output

    kernel = functools.partial(_actor_mlp_kernel,
                               max_action=float(max_action),
                               action_dim=action_dim)

    out = pl.pallas_call(
        kernel,
        out_shape=jax.ShapeDtypeStruct((batch_pad, action_dim), jnp.float32),
        grid=grid,
        in_specs=[
            pl.BlockSpec((tile_b, state_dim), lambda i: (i, 0)),  # x tile streams
            pl.BlockSpec((state_dim, h_pad), lambda i: (0, 0)),   # weights resident
            pl.BlockSpec((1, h_pad), lambda i: (0, 0)),
            pl.BlockSpec((h_pad, h_pad), lambda i: (0, 0)),
            pl.BlockSpec((1, h_pad), lambda i: (0, 0)),
            pl.BlockSpec((h_pad, out_pad), lambda i: (0, 0)),
            pl.BlockSpec((1, out_pad), lambda i: (0, 0)),
        ],
        # Block last dim == full array dim (action_dim), so the (8,128) rule holds
        # and each tile's HBM write is contiguous and un-padded.
        out_specs=pl.BlockSpec((tile_b, action_dim), lambda i: (i, 0)),
        compiler_params=pltpu.CompilerParams(
            dimension_semantics=("parallel",)),
        cost_estimate=pl.CostEstimate(
            flops=flops,
            transcendentals=transcendentals,
            bytes_accessed=bytes_accessed),
    )(x_in, w1p, b1p, w2p, b2p, w3p, b3p)

    # Slice away batch padding only (feature dim is already exact).
    return out[:batch] if batch_pad != batch else out


def init_actor_params(key, state_dim, action_dim, layer_1=64, layer_2=64):
    """nn.Linear-style U(-1/sqrt(fan_in), 1/sqrt(fan_in)) init.

    Weights are returned already transposed to (in, out); biases are (1, out)."""
    ks = jax.random.split(key, 6)

    def linear(kw, kb, fan_in, fan_out):
        bound = 1.0 / jnp.sqrt(jnp.float32(fan_in))
        w = jax.random.uniform(kw, (fan_in, fan_out), jnp.float32, -bound, bound)
        b = jax.random.uniform(kb, (1, fan_out), jnp.float32, -bound, bound)
        return w, b

    w1, b1 = linear(ks[0], ks[1], state_dim, layer_1)
    w2, b2 = linear(ks[2], ks[3], layer_1, layer_2)
    w3, b3 = linear(ks[4], ks[5], layer_2, action_dim)
    return w1, b1, w2, b2, w3, b3


def actor_forward_ref(x, w1, b1, w2, b2, w3, b3, max_action=1.0):
    """Pure-JAX f32 reference mirroring Actor.forward (layer_norm=False, use_max_action=True)."""
    h1 = jnp.tanh(x @ w1 + b1)
    h2 = jnp.tanh(h1 @ w2 + b2)
    return max_action * jnp.tanh(h2 @ w3 + b3)


if __name__ == "__main__":
    state_dim = 32
    action_dim = 8
    layer_1 = 64
    layer_2 = 64
    max_action = 2.0

    key = jax.random.PRNGKey(0)
    k_params, k_x1, k_x2 = jax.random.split(key, 3)
    params = init_actor_params(k_params, state_dim, action_dim, layer_1, layer_2)

    # Tolerances relaxed vs. the pure-f32 version because the MXU operands are bf16
    # (accumulation stays f32); tanh-bounded policy outputs make this acceptable.
    tol = dict(atol=1e-2, rtol=1e-2)

    # Small batch, not a multiple of the sublane tile -> exercises row padding/slicing.
    x_small = jax.random.normal(k_x1, (10, state_dim), jnp.float32)
    out_small = jax.block_until_ready(
        actor_forward(x_small, *params, max_action=max_action))
    ref_small = actor_forward_ref(x_small, *params, max_action=max_action)
    assert out_small.shape == (10, action_dim)
    assert jnp.allclose(out_small, ref_small, **tol), "mismatch (small batch)"

    # Larger batch -> balanced 2-tile grid (768 rows/tile, no batch padding).
    x_big = jax.random.normal(k_x2, (1536, state_dim), jnp.float32)
    out_big = jax.block_until_ready(
        actor_forward(x_big, *params, max_action=max_action))
    ref_big = actor_forward_ref(x_big, *params, max_action=max_action)
    assert out_big.shape == (1536, action_dim)
    assert jnp.allclose(out_big, ref_big, **tol), "mismatch (big batch)"

    print("KERNEL_OK")
</pallas_src>

<mosaic_0001>
module attributes {stable_mosaic.version = 11 : i64} {
  func.func @_actor_mlp_kernel(%arg0: i32, %arg1: memref<16x32xf32, #tpu.memory_space<vmem>>, %arg2: memref<32x128xbf16, #tpu.memory_space<vmem>>, %arg3: memref<1x128xf32, #tpu.memory_space<vmem>>, %arg4: memref<128x128xbf16, #tpu.memory_space<vmem>>, %arg5: memref<1x128xf32, #tpu.memory_space<vmem>>, %arg6: memref<128x128xbf16, #tpu.memory_space<vmem>>, %arg7: memref<1x128xf32, #tpu.memory_space<vmem>>, %arg8: memref<16x8xf32, #tpu.memory_space<vmem>>) attributes {dimension_semantics = [#tpu.dimension_semantics<parallel>], iteration_bounds = array<i64: 1>, scalar_prefetch = 0 : i64, scratch_operands = 0 : i64, tpu.core_type = #tpu.core_type<tc>, window_params = [{transform_indices = @transform_0, window_bounds = array<i64: 16, 32>}, {pipeline_mode = #tpu.pipeline_mode<synchronous>, transform_indices = @transform_1, window_bounds = array<i64: 32, 128>}, {pipeline_mode = #tpu.pipeline_mode<synchronous>, transform_indices = @transform_2, window_bounds = array<i64: 1, 128>}, {pipeline_mode = #tpu.pipeline_mode<synchronous>, transform_indices = @transform_3, window_bounds = array<i64: 128, 128>}, {pipeline_mode = #tpu.pipeline_mode<synchronous>, transform_indices = @transform_4, window_bounds = array<i64: 1, 128>}, {pipeline_mode = #tpu.pipeline_mode<synchronous>, transform_indices = @transform_5, window_bounds = array<i64: 128, 128>}, {pipeline_mode = #tpu.pipeline_mode<synchronous>, transform_indices = @transform_6, window_bounds = array<i64: 1, 128>}, {transform_indices = @transform_7, window_bounds = array<i64: 16, 8>}]} {
    %c0 = arith.constant 0 : index
    %c0_0 = arith.constant 0 : index
    %0 = vector.load %arg1[%c0, %c0_0] : memref<16x32xf32, #tpu.memory_space<vmem>>, vector<16x32xf32>
    %1 = arith.truncf %0 : vector<16x32xf32> to vector<16x32xbf16>
    %c0_1 = arith.constant 0 : index
    %c0_2 = arith.constant 0 : index
    %2 = vector.load %arg2[%c0_1, %c0_2] : memref<32x128xbf16, #tpu.memory_space<vmem>>, vector<32x128xbf16>
    %cst = arith.constant dense<0.000000e+00> : vector<16x128xf32>
    %3 = tpu.matmul %1, %2, %cst {dimension_numbers = #tpu.dot_dimension_numbers<[1], [0], [0], [1], [0, 0, 1, 1], [], []>} : vector<16x32xbf16>, vector<32x128xbf16>, vector<16x128xf32> -> vector<16x128xf32>
    %c0_3 = arith.constant 0 : index
    %c0_4 = arith.constant 0 : index
    %4 = vector.load %arg3[%c0_3, %c0_4] : memref<1x128xf32, #tpu.memory_space<vmem>>, vector<1x128xf32>
    %5 = vector.broadcast %4 : vector<1x128xf32> to vector<16x128xf32>
    %6 = arith.addf %3, %5 : vector<16x128xf32>
    %7 = math.tanh %6 : vector<16x128xf32>
    %8 = arith.truncf %7 : vector<16x128xf32> to vector<16x128xbf16>
    %c0_5 = arith.constant 0 : index
    %c0_6 = arith.constant 0 : index
    %9 = vector.load %arg4[%c0_5, %c0_6] : memref<128x128xbf16, #tpu.memory_space<vmem>>, vector<128x128xbf16>
    %cst_7 = arith.constant dense<0.000000e+00> : vector<16x128xf32>
    %10 = tpu.matmul %8, %9, %cst_7 {dimension_numbers = #tpu.dot_dimension_numbers<[1], [0], [0], [1], [0, 0, 1, 1], [], []>} : vector<16x128xbf16>, vector<128x128xbf16>, vector<16x128xf32> -> vector<16x128xf32>
    %c0_8 = arith.constant 0 : index
    %c0_9 = arith.constant 0 : index
    %11 = vector.load %arg5[%c0_8, %c0_9] : memref<1x128xf32, #tpu.memory_space<vmem>>, vector<1x128xf32>
    %12 = vector.broadcast %11 : vector<1x128xf32> to vector<16x128xf32>
    %13 = arith.addf %10, %12 : vector<16x128xf32>
    %14 = math.tanh %13 : vector<16x128xf32>
    %15 = arith.truncf %14 : vector<16x128xf32> to vector<16x128xbf16>
    %c0_10 = arith.constant 0 : index
    %c0_11 = arith.constant 0 : index
    %16 = vector.load %arg6[%c0_10, %c0_11] : memref<128x128xbf16, #tpu.memory_space<vmem>>, vector<128x128xbf16>
    %cst_12 = arith.constant dense<0.000000e+00> : vector<16x128xf32>
    %17 = tpu.matmul %15, %16, %cst_12 {dimension_numbers = #tpu.dot_dimension_numbers<[1], [0], [0], [1], [0, 0, 1, 1], [], []>} : vector<16x128xbf16>, vector<128x128xbf16>, vector<16x128xf32> -> vector<16x128xf32>
    %c0_13 = arith.constant 0 : index
    %c0_14 = arith.constant 0 : index
    %18 = vector.load %arg7[%c0_13, %c0_14] : memref<1x128xf32, #tpu.memory_space<vmem>>, vector<1x128xf32>
    %19 = vector.broadcast %18 : vector<1x128xf32> to vector<16x128xf32>
    %20 = arith.addf %17, %19 : vector<16x128xf32>
    %21 = math.tanh %20 : vector<16x128xf32>
    %cst_15 = arith.constant 2.000000e+00 : f32
    %22 = vector.broadcast %cst_15 : f32 to vector<16x128xf32>
    %23 = arith.mulf %22, %21 : vector<16x128xf32>
    %24 = vector.extract_strided_slice %23 {offsets = [0, 0], sizes = [16, 8], strides = [1, 1]} : vector<16x128xf32> to vector<16x8xf32>
    %c0_16 = arith.constant 0 : index
    %c0_17 = arith.constant 0 : index
    %25 = vector.load %arg8[%c0_16, %c0_17] : memref<16x8xf32, #tpu.memory_space<vmem>>, vector<16x8xf32>
    tpu.vector_store %arg8[%c0_16, %c0_17], %24 {strides = array<i32>} : memref<16x8xf32, #tpu.memory_space<vmem>>, vector<16x8xf32>,
    return
  }
  func.func @transform_0(%arg0: i32) -> (i32, i32) {
    %c0_i32 = arith.constant 0 : i32
    %c0_i32_0 = arith.constant 0 : i32
    return %arg0, %c0_i32 : i32, i32
  }
  func.func @transform_1(%arg0: i32) -> (i32, i32) {
    %c0_i32 = arith.constant 0 : i32
    %c0_i32_0 = arith.constant 0 : i32
    %c0_i32_1 = arith.constant 0 : i32
    return %c0_i32, %c0_i32_0 : i32, i32
  }
  func.func @transform_2(%arg0: i32) -> (i32, i32) {
    %c0_i32 = arith.constant 0 : i32
    %c0_i32_0 = arith.constant 0 : i32
    %c0_i32_1 = arith.constant 0 : i32
    return %c0_i32, %c0_i32_0 : i32, i32
  }
  func.func @transform_3(%arg0: i32) -> (i32, i32) {
    %c0_i32 = arith.constant 0 : i32
    %c0_i32_0 = arith.constant 0 : i32
    %c0_i32_1 = arith.constant 0 : i32
    return %c0_i32, %c0_i32_0 : i32, i32
  }
  func.func @transform_4(%arg0: i32) -> (i32, i32) {
    %c0_i32 = arith.constant 0 : i32
    %c0_i32_0 = arith.constant 0 : i32
    %c0_i32_1 = arith.constant 0 : i32
    return %c0_i32, %c0_i32_0 : i32, i32
  }
  func.func @transform_5(%arg0: i32) -> (i32, i32) {
    %c0_i32 = arith.constant 0 : i32
    %c0_i32_0 = arith.constant 0 : i32
    %c0_i32_1 = arith.constant 0 : i32
    return %c0_i32, %c0_i32_0 : i32, i32
  }
  func.func @transform_6(%arg0: i32) -> (i32, i32) {
    %c0_i32 = arith.constant 0 : i32
    %c0_i32_0 = arith.constant 0 : i32
    %c0_i32_1 = arith.constant 0 : i32
    return %c0_i32, %c0_i32_0 : i32, i32
  }
  func.func @transform_7(%arg0: i32) -> (i32, i32) {
    %c0_i32 = arith.constant 0 : i32
    %c0_i32_0 = arith.constant 0 : i32
    return %arg0, %c0_i32 : i32, i32
  }
}

</mosaic_0001>

<llo_original>
// kernel: actor_forward.1
$region0: #{actor_forward.1}
  #allocation0 [shape = 'u32[]', space=smem, size = 0x4, offset = 0x4, fixed_abs, tag = 'smem constant byte address 0x4 - core index']
  #allocation1 [shape = 'u32[72,128]{1,0:T(1,128)}', space=vmem, size = 0x9000, scoped, tag = 'internal scratch']
  %s0 = inlined_call_operand.vmem [shape: f32[16,32], index: 0, kind: input, shape index: {}]
  %s1 = inlined_call_operand.vmem [shape: bf16[32,128], index: 1, kind: input, shape index: {}]
  %s2 = inlined_call_operand.vmem [shape: f32[1,128], index: 2, kind: input, shape index: {}]
  %s3 = inlined_call_operand.vmem [shape: bf16[128,128], index: 3, kind: input, shape index: {}]
  %s4 = inlined_call_operand.vmem [shape: f32[1,128], index: 4, kind: input, shape index: {}]
  %s5 = inlined_call_operand.vmem [shape: bf16[128,128], index: 5, kind: input, shape index: {}]
  %s6 = inlined_call_operand.vmem [shape: f32[1,128], index: 6, kind: input, shape index: {}]
  %s7 = inlined_call_operand.vmem [shape: f32[16,8], index: 7, kind: output, shape index: {}]
  %s8 = sld [smem:[#allocation0]]
  $region38: #{actor_forward.1} parent=0
    _
  %s10 = ssub.s32 1, %s8
  %s11 = scalar_select 0, %s10, %s8
  // Predicated region
  $region2: #{actor_forward.1} parent=0 // pred_check
    _
  $region3: #{actor_forward.1} parent=0 // pred_check_branch
    %13 = sbr.rel (0) target = $region5
  $region4: #{actor_forward.1} parent=0 // pred_region
    _
  $region5: #{actor_forward.1} parent=0 // pred_fallthru
    _
  // Predicated region
  $region6: #{actor_forward.1} parent=0 // pred_check
    _
  $region7: #{actor_forward.1} parent=0 // pred_check_branch
    %15 = sbr.rel (0) target = $region9
  $region8: #{actor_forward.1} parent=0 // pred_region
    _
  $region9: #{actor_forward.1} parent=0 // pred_fallthru
    _
  // Predicated region
  $region10: #{actor_forward.1} parent=0 // pred_check
    _
  $region11: #{actor_forward.1} parent=0 // pred_check_branch
    %17 = sbr.rel (0) target = $region13
  $region12: #{actor_forward.1} parent=0 // pred_region
    _
  $region13: #{actor_forward.1} parent=0 // pred_fallthru
    _
  // Predicated region
  $region14: #{actor_forward.1} parent=0 // pred_check
    _
  $region15: #{actor_forward.1} parent=0 // pred_check_branch
    %19 = sbr.rel (0) target = $region17
  $region16: #{actor_forward.1} parent=0 // pred_region
    _
  $region17: #{actor_forward.1} parent=0 // pred_fallthru
    _
  // Predicated region
  $region18: #{actor_forward.1} parent=0 // pred_check
    _
  $region19: #{actor_forward.1} parent=0 // pred_check_branch
    %21 = sbr.rel (0) target = $region21
  $region20: #{actor_forward.1} parent=0 // pred_region
    _
  $region21: #{actor_forward.1} parent=0 // pred_fallthru
    _
  // Predicated region
  $region22: #{actor_forward.1} parent=0 // pred_check
    _
  $region23: #{actor_forward.1} parent=0 // pred_check_branch
    %23 = sbr.rel (0) target = $region25
  $region24: #{actor_forward.1} parent=0 // pred_region
    _
  $region25: #{actor_forward.1} parent=0 // pred_fallthru
    _
  // Predicated region
  $region26: #{actor_forward.1} parent=0 // pred_check
    _
  $region27: #{actor_forward.1} parent=0 // pred_check_branch
    %25 = sbr.rel (0) target = $region29
  $region28: #{actor_forward.1} parent=0 // pred_region
    _
  $region29: #{actor_forward.1} parent=0 // pred_fallthru
    _
  %v27 = vld [vmem:[%s0] sm:$0xff]
  %v28 = vld [vmem:[%s0 + $0x8] sm:$0xff]
  %v29 = vpack.c.bf16 %v28, %v27
  %v30 = vld [vmem:[%s1] sm:$0xf]
  %v31 = vld [vmem:[%s1 + $0x4] sm:$0xf]
  %v32 = vld [vmem:[%s1 + $0x8] sm:$0xf]
  %v33 = vld [vmem:[%s1 + $0xc] sm:$0xf]
  %v34 = vld [vmem:[%s2] sm:$0x1]
  %v36 = vperm.slane %v34, 0
  %v42 = vunpack.c.l.b16 %v30
  %v43 = vunpack.c.l.b16 %v31
  %v44 = vunpack.c.l.b16 %v32
  %v45 = vunpack.c.l.b16 %v33
  %v46 = vpack.c.b16 %v43, %v42
  %v47 = vpack.c.b16 %v45, %v44
  %vm50 = vcmask 261120
  %v52 = vsel %vm50, %v29, 0
  %54 = vmatpush.bf16.msra.mxu0 0
  %55 = vmatpush.bf16.msra.mxu0 0
  %56 = vmatpush.bf16.msra.mxu0 0
  %57 = vmatpush.bf16.msra.mxu0 0
  %58 = vmatpush.bf16.msra.mxu0 0
  %59 = vmatpush.bf16.msra.mxu0 0
  %60 = vmatpush.bf16.msra.mxu0 %v47
  %61 = vmatpush.bf16.msra.mxu0 %v46
  %62 = vmatmul.bf16.gmra.mxu0 %v52
  %v63 = vpop.f32.mrf.mxu0
  %v64 = vadd.f32 %v36, %v63
  %v65 = vpop.f32.mrf.mxu0
  %v66 = vadd.f32 %v36, %v65
  %67 = vdwg.mxu0
  %v68 = vtanh.pop %v64
  %v69 = vtanh.pop %v66
  %v70 = vpack.c.bf16 %v69, %v68
  %v71 = vld [vmem:[%s3] sm:$0xf]
  %v72 = vld [vmem:[%s3 + $0x4] sm:$0xf]
  %v73 = vld [vmem:[%s3 + $0x8] sm:$0xf]
  %v74 = vld [vmem:[%s3 + $0xc] sm:$0xf]
  %v75 = vld [vmem:[%s3 + $0x10] sm:$0xf]
  %v76 = vld [vmem:[%s3 + $0x14] sm:$0xf]
  %v77 = vld [vmem:[%s3 + $0x18] sm:$0xf]
  %v78 = vld [vmem:[%s3 + $0x1c] sm:$0xf]
  %v79 = vld [vmem:[%s3 + $0x20] sm:$0xf]
  %v80 = vld [vmem:[%s3 + $0x24] sm:$0xf]
  %v81 = vld [vmem:[%s3 + $0x28] sm:$0xf]
  %v82 = vld [vmem:[%s3 + $0x2c] sm:$0xf]
  %v83 = vld [vmem:[%s3 + $0x30] sm:$0xf]
  %v84 = vld [vmem:[%s3 + $0x34] sm:$0xf]
  %v85 = vld [vmem:[%s3 + $0x38] sm:$0xf]
  %v86 = vld [vmem:[%s3 + $0x3c] sm:$0xf]
  %v87 = vld [vmem:[%s4] sm:$0x1]
  %v89 = vperm.slane %v87, 0
  %v107 = vunpack.c.l.b16 %v71
  %v108 = vunpack.c.l.b16 %v72
  %v109 = vunpack.c.l.b16 %v73
  %v110 = vunpack.c.l.b16 %v74
  %v111 = vunpack.c.l.b16 %v75
  %v112 = vunpack.c.l.b16 %v76
  %v113 = vunpack.c.l.b16 %v77
  %v114 = vunpack.c.l.b16 %v78
  %v115 = vunpack.c.l.b16 %v79
  %v116 = vunpack.c.l.b16 %v80
  %v117 = vunpack.c.l.b16 %v81
  %v118 = vunpack.c.l.b16 %v82
  %v119 = vunpack.c.l.b16 %v83
  %v120 = vunpack.c.l.b16 %v84
  %v121 = vunpack.c.l.b16 %v85
  %v122 = vunpack.c.l.b16 %v86
  %v123 = vpack.c.b16 %v108, %v107
  %v124 = vpack.c.b16 %v110, %v109
  %v125 = vpack.c.b16 %v112, %v111
  %v126 = vpack.c.b16 %v114, %v113
  %v127 = vpack.c.b16 %v116, %v115
  %v128 = vpack.c.b16 %v118, %v117
  %v129 = vpack.c.b16 %v120, %v119
  %v130 = vpack.c.b16 %v122, %v121
  %139 = vmatpush.bf16.msra.mxu0 %v130
  %140 = vmatpush.bf16.msra.mxu0 %v129
  %141 = vmatpush.bf16.msra.mxu0 %v128
  %142 = vmatpush.bf16.msra.mxu0 %v127
  %143 = vmatpush.bf16.msra.mxu0 %v126
  %144 = vmatpush.bf16.msra.mxu0 %v125
  %145 = vmatpush.bf16.msra.mxu0 %v124
  %146 = vmatpush.bf16.msra.mxu0 %v123
  %147 = vmatmul.bf16.gmra.mxu0 %v70
  %v148 = vpop.f32.mrf.mxu0
  %v149 = vadd.f32 %v89, %v148
  %v150 = vpop.f32.mrf.mxu0
  %v151 = vadd.f32 %v89, %v150
  %152 = vdwg.mxu0
  %v153 = vtanh.pop %v149
  %v154 = vtanh.pop %v151
  %v155 = vpack.c.bf16 %v154, %v153
  %v156 = vld [vmem:[%s5] sm:$0xf]
  %v157 = vld [vmem:[%s5 + $0x4] sm:$0xf]
  %v158 = vld [vmem:[%s5 + $0x8] sm:$0xf]
  %v159 = vld [vmem:[%s5 + $0xc] sm:$0xf]
  %v160 = vld [vmem:[%s5 + $0x10] sm:$0xf]
  %v161 = vld [vmem:[%s5 + $0x14] sm:$0xf]
  %v162 = vld [vmem:[%s5 + $0x18] sm:$0xf]
  %v163 = vld [vmem:[%s5 + $0x1c] sm:$0xf]
  %v164 = vld [vmem:[%s5 + $0x20] sm:$0xf]
  %v165 = vld [vmem:[%s5 + $0x24] sm:$0xf]
  %v166 = vld [vmem:[%s5 + $0x28] sm:$0xf]
  %v167 = vld [vmem:[%s5 + $0x2c] sm:$0xf]
  %v168 = vld [vmem:[%s5 + $0x30] sm:$0xf]
  %v169 = vld [vmem:[%s5 + $0x34] sm:$0xf]
  %v170 = vld [vmem:[%s5 + $0x38] sm:$0xf]
  %v171 = vld [vmem:[%s5 + $0x3c] sm:$0xf]
  %v172 = vld [vmem:[%s6] sm:$0x1]
  %v174 = vperm.slane %v172, 0
  %v192 = vunpack.c.l.b16 %v156
  %v193 = vunpack.c.l.b16 %v157
  %v194 = vunpack.c.l.b16 %v158
  %v195 = vunpack.c.l.b16 %v159
  %v196 = vunpack.c.l.b16 %v160
  %v197 = vunpack.c.l.b16 %v161
  %v198 = vunpack.c.l.b16 %v162
  %v199 = vunpack.c.l.b16 %v163
  %v200 = vunpack.c.l.b16 %v164
  %v201 = vunpack.c.l.b16 %v165
  %v202 = vunpack.c.l.b16 %v166
  %v203 = vunpack.c.l.b16 %v167
  %v204 = vunpack.c.l.b16 %v168
  %v205 = vunpack.c.l.b16 %v169
  %v206 = vunpack.c.l.b16 %v170
  %v207 = vunpack.c.l.b16 %v171
  %v208 = vpack.c.b16 %v193, %v192
  %v209 = vpack.c.b16 %v195, %v194
  %v210 = vpack.c.b16 %v197, %v196
  %v211 = vpack.c.b16 %v199, %v198
  %v212 = vpack.c.b16 %v201, %v200
  %v213 = vpack.c.b16 %v203, %v202
  %v214 = vpack.c.b16 %v205, %v204
  %v215 = vpack.c.b16 %v207, %v206
  %224 = vmatpush.bf16.msra.mxu0 %v215
  %225 = vmatpush.bf16.msra.mxu0 %v214
  %226 = vmatpush.bf16.msra.mxu0 %v213
  %227 = vmatpush.bf16.msra.mxu0 %v212
  %228 = vmatpush.bf16.msra.mxu0 %v211
  %229 = vmatpush.bf16.msra.mxu0 %v210
  %230 = vmatpush.bf16.msra.mxu0 %v209
  %231 = vmatpush.bf16.msra.mxu0 %v208
  %232 = vmatmul.bf16.gmra.mxu0 %v155
  %v233 = vpop.f32.mrf.mxu0
  %v234 = vadd.f32 %v174, %v233
  %v235 = vpop.f32.mrf.mxu0
  %v236 = vadd.f32 %v174, %v235
  %237 = vdwg.mxu0
  %v238 = vtanh.pop %v234
  %v239 = vtanh.pop %v236
  %v240 = vmul.f32 %v238, 2.0
  %v241 = vmul.f32 %v239, 2.0
  %vm242 = vcmask 64512
  %243 = vst.msk [vmem:[%s7] sm:$0xff] %vm242, %v240
  %244 = vst.msk [vmem:[%s7 + $0x8] sm:$0xff] %vm242, %v241
  // Predicated region
  $region30: #{actor_forward.1} parent=0 // pred_check
    _
  $region31: #{actor_forward.1} parent=0 // pred_check_branch
    %246 = sbr.rel (0) target = $region33
  $region32: #{actor_forward.1} parent=0 // pred_region
    _
  $region33: #{actor_forward.1} parent=0 // pred_fallthru
    _
  // Predicated region
  $region34: #{actor_forward.1} parent=0 // pred_check
    _
  $region35: #{actor_forward.1} parent=0 // pred_check_branch
    %248 = sbr.rel (0) target = $region37
  $region36: #{actor_forward.1} parent=0 // pred_region
    _
  $region37: #{actor_forward.1} parent=0 // pred_fallthru
    _

</llo_original>
